<compile_context>
chip_gen: v7x
topology: tpu7x:2x2x1
jax: 0.10.0
libtpu: 0.0.40
codegen_flags: <defaults>
</compile_context>

<pallas_src>
import functools
import math

import jax
import jax.numpy as jnp
from jax import lax
from jax.experimental import pallas as pl
from jax.experimental.pallas import tpu as pltpu


_VMEM_LIMIT = 32 * 1024 * 1024         # scoped-VMEM limit we request (safe v5e..v7x)
_VMEM_BUDGET = 24 * 1024 * 1024        # what our own buffers may use
_TABLE_VMEM_BUDGET = 6 * 1024 * 1024   # fast path iff table <= this (2x resident)
_MAX_TOKENS_PER_CALL = 32768           # keeps scalar-prefetched ids small in SMEM


def _round_up(x: int, m: int) -> int:
    return ((x + m - 1) // m) * m


# ---------------------------------------------------------------------------
# Fast path: table resident in VMEM, gather via dynamic vector loads.
# ---------------------------------------------------------------------------
def _token_embedding_vmem_kernel(ids_ref, table_ref, out_ref, *, scale):
    """ids_ref: SMEM (N_pad,) int32; table_ref: VMEM (V, E); out_ref: VMEM (tm, E)."""
    tm = out_ref.shape[0]
    base = pl.program_id(0) * tm

    def body(j, carry):
        tok = ids_ref[base + j]
        row = table_ref[pl.ds(tok, 1), :]
        # Only compute: fold sqrt(emb_size) into the lane-dense row store.
        out_ref[pl.ds(j, 1), :] = (row * scale).astype(out_ref.dtype)
        return carry

    lax.fori_loop(0, tm, body, 0, unroll=8)


# ---------------------------------------------------------------------------
# Large-table path: HBM row gather, double-buffered across grid steps.
# ---------------------------------------------------------------------------
def _token_embedding_hbm_kernel(ids_ref, table_hbm, out_ref, rows_vmem, sems,
                                *, scale):
    """ids_ref: SMEM (N_pad,) int32; table_hbm: HBM (V, E); out_ref: VMEM (tm, E);
    rows_vmem: VMEM (2, tm, E) scratch; sems: DMA semaphores (2,)."""
    i = pl.program_id(0)
    n = pl.num_programs(0)
    tm = out_ref.shape[0]
    slot = i % 2

    def issue_tile(tile, s):
        # All tm row copies of a tile share one semaphore (aggregate wait below).
        base = tile * tm

        def body(j, carry):
            tok = ids_ref[base + j]
            pltpu.make_async_copy(
                table_hbm.at[pl.ds(tok, 1), :],      # (1, E) row in HBM
                rows_vmem.at[s, pl.ds(j, 1), :],     # (1, E) slot in VMEM
                sems.at[s],
            ).start()
            return carry

        # TODO(synk): dedupe repeated token ids within a tile before issuing
        # gathers (mostly a v7x bandwidth-efficiency win).
        lax.fori_loop(0, tm, body, 0, unroll=8)

    # Prime the pipeline: tile 0 is only issued on the first step.
    @pl.when(i == 0)
    def _():
        issue_tile(0, 0)

    # Prefetch the NEXT tile's rows before waiting on the current slot so the
    # gather latency overlaps with this step's wait + scale + store.
    @pl.when(i + 1 < n)
    def _():
        issue_tile(i + 1, (i + 1) % 2)

    # Single aggregate wait for all tm row copies of the current slot: the
    # descriptor only supplies the total transfer size (tm * E * itemsize).
    pltpu.make_async_copy(
        rows_vmem.at[slot], rows_vmem.at[slot], sems.at[slot]
    ).wait()

    out_ref[...] = (rows_vmem[slot] * scale).astype(out_ref.dtype)


# ---------------------------------------------------------------------------
# Wrapper
# ---------------------------------------------------------------------------
def _token_embedding_flat(flat, table, *, tm, force_hbm):
    """flat: (N,) int32 in [0, V); table: (V, E). Returns (N, E)."""
    V, E = table.shape
    dtype = table.dtype
    itemsize = jnp.dtype(dtype).itemsize
    row_bytes = E * itemsize
    table_bytes = V * E * itemsize
    scale = float(math.sqrt(E))
    N = int(flat.shape[0])

    use_vmem_table = (not force_hbm) and table_bytes <= _TABLE_VMEM_BUDGET

    # Sublane minimum per dtype: 8 (f32) / 16 (bf16) / 32 (int8/fp8).
    sub = max(8, 32 // itemsize)

    if use_vmem_table:
        avail = max(_VMEM_BUDGET - 2 * table_bytes, 2 * sub * row_bytes)
        max_tm = max(sub, avail // (2 * row_bytes))          # double-buffered out
    else:
        max_tm = max(sub, _VMEM_BUDGET // (4 * row_bytes))   # 2x out + 2x rows scratch

    if tm is None:
        tm_eff = 512
        # Keep >= 2 grid steps so a v7x megacore has work for both TensorCores.
        if N > sub:
            tm_eff = min(tm_eff, _round_up((N + 1) // 2, sub))
    else:
        tm_eff = int(tm)
    tm_eff = int(min(tm_eff, max_tm, _round_up(N, sub)))
    tm_eff = max(sub, (tm_eff // sub) * sub)

    num_steps = int(pl.cdiv(N, tm_eff))
    n_pad = num_steps * tm_eff
    if n_pad != N:
        # Pad with valid id 0; the extra rows are sliced off below.
        flat = jnp.pad(flat, (0, n_pad - N))

    out_spec = pl.BlockSpec((tm_eff, E), lambda i, ids: (i, 0))
    out_shape = jax.ShapeDtypeStruct((n_pad, E), dtype)

    if use_vmem_table:
        grid_spec = pltpu.PrefetchScalarGridSpec(
            num_scalar_prefetch=1,                            # flat ids -> SMEM
            grid=(num_steps,),
            in_specs=[pl.BlockSpec((V, E), lambda i, ids: (0, 0))],  # resident table
            out_specs=out_spec,
        )
        kernel = functools.partial(_token_embedding_vmem_kernel, scale=scale)
        dims = ("parallel",)                                  # token tiles independent
    else:
        grid_spec = pltpu.PrefetchScalarGridSpec(
            num_scalar_prefetch=1,                            # flat ids -> SMEM
            grid=(num_steps,),
            in_specs=[pl.BlockSpec(memory_space=pl.ANY)],     # table stays in HBM
            out_specs=out_spec,
            scratch_shapes=[
                pltpu.VMEM((2, tm_eff, E), dtype),            # double-buffered gather tile
                pltpu.SemaphoreType.DMA((2,)),                # one shared sem per slot
            ],
        )
        kernel = functools.partial(_token_embedding_hbm_kernel, scale=scale)
        # Cross-step prefetch carries scratch state between steps -> sequential.
        dims = ("arbitrary",)

    out = pl.pallas_call(
        kernel,
        out_shape=out_shape,
        grid_spec=grid_spec,
        compiler_params=pltpu.CompilerParams(
            dimension_semantics=dims,
            vmem_limit_bytes=_VMEM_LIMIT,
        ),
    )(flat, table)
    return out[:N]


def token_embedding(tokens, table, *, tm=None, force_hbm=False):
    """TokenEmbedding forward: embedding(tokens) * sqrt(emb_size).

    tokens: integer array of any shape; table: (V, E) float. Returns (*tokens.shape, E).
    """
    V, E = table.shape
    flat = tokens.reshape(-1).astype(jnp.int32)
    # torch.nn.Embedding raises on out-of-range ids; clamp so the row access /
    # row DMA stays in bounds.  # TODO(synk): no in-kernel error reporting.
    flat = jnp.clip(flat, 0, V - 1)
    N = int(flat.shape[0])
    if N == 0:
        return jnp.zeros((*tokens.shape, E), table.dtype)

    outs = []
    for start in range(0, N, _MAX_TOKENS_PER_CALL):
        chunk = flat[start:start + _MAX_TOKENS_PER_CALL]
        outs.append(_token_embedding_flat(chunk, table, tm=tm, force_hbm=force_hbm))
    out_flat = outs[0] if len(outs) == 1 else jnp.concatenate(outs, axis=0)
    return out_flat.reshape(*tokens.shape, E)


if __name__ == "__main__":
    key = jax.random.PRNGKey(0)
    k_tab, k_tok = jax.random.split(key)

    vocab_size = 64
    emb_size = 128
    batch, seq = 2, 8

    # nn.Embedding default init: N(0, 1)
    table = jax.random.normal(k_tab, (vocab_size, emb_size), dtype=jnp.float32)
    tokens = jax.random.randint(k_tok, (batch, seq), 0, vocab_size, dtype=jnp.int32)

    ref = jnp.take(table, tokens, axis=0) * math.sqrt(emb_size)

    # 1) VMEM-resident fast path, auto tile (-> 2 grid steps, resident table).
    out_fast = jax.block_until_ready(token_embedding(tokens, table))
    assert out_fast.shape == (batch, seq, emb_size)
    assert jnp.allclose(out_fast, ref, atol=1e-5, rtol=1e-5)

    # 2) Fast path with an explicit single-tile grid.
    out_fast1 = jax.block_until_ready(token_embedding(tokens, table, tm=16))
    assert jnp.allclose(out_fast1, ref, atol=1e-5, rtol=1e-5)

    # 3) Large-table path forced at small shapes: double-buffered HBM row
    #    gather with a single aggregate DMA wait per tile (2 grid steps).
    out_hbm = jax.block_until_ready(
        token_embedding(tokens, table, force_hbm=True, tm=8))
    assert jnp.allclose(out_hbm, ref, atol=1e-5, rtol=1e-5)

    print("KERNEL_OK")
</pallas_src>

<mosaic_0001>
module attributes {stable_mosaic.version = 11 : i64} {
  func.func @_token_embedding_vmem_kernel(%arg0: i32, %arg1: memref<16xi32, #tpu.memory_space<smem>>, %arg2: memref<64x128xf32, #tpu.memory_space<vmem>>, %arg3: memref<8x128xf32, #tpu.memory_space<vmem>>) attributes {dimension_semantics = [#tpu.dimension_semantics<parallel>], iteration_bounds = array<i64: 2>, scalar_prefetch = 1 : i64, scratch_operands = 0 : i64, tpu.core_type = #tpu.core_type<tc>, window_params = [{pipeline_mode = #tpu.pipeline_mode<synchronous>, transform_indices = @transform_0, window_bounds = array<i64: 64, 128>}, {transform_indices = @transform_1, window_bounds = array<i64: 8, 128>}]} {
    %c8_i32 = arith.constant 8 : i32
    %0 = arith.muli %arg0, %c8_i32 : i32
    %c0_i32 = arith.constant 0 : i32
    %1 = arith.addi %0, %c0_i32 : i32
    %2 = arith.index_cast %1 : i32 to index
    %3 = memref.load %arg1[%2] : memref<16xi32, #tpu.memory_space<smem>>
    %4 = arith.index_cast %3 : i32 to index
    %c0 = arith.constant 0 : index
    %5 = vector.load %arg2[%4, %c0] : memref<64x128xf32, #tpu.memory_space<vmem>>, vector<1x128xf32>
    %cst = arith.constant 11.3137083 : f32
    %6 = vector.broadcast %cst : f32 to vector<1x128xf32>
    %7 = arith.mulf %5, %6 : vector<1x128xf32>
    %8 = arith.index_cast %c0_i32 : i32 to index
    %c0_0 = arith.constant 0 : index
    %9 = vector.load %arg3[%8, %c0_0] : memref<8x128xf32, #tpu.memory_space<vmem>>, vector<1x128xf32>
    tpu.vector_store %arg3[%8, %c0_0], %7 {strides = array<i32>} : memref<8x128xf32, #tpu.memory_space<vmem>>, vector<1x128xf32>,
    %c1_i32 = arith.constant 1 : i32
    %10 = arith.addi %0, %c1_i32 : i32
    %11 = arith.index_cast %10 : i32 to index
    %12 = memref.load %arg1[%11] : memref<16xi32, #tpu.memory_space<smem>>
    %13 = arith.index_cast %12 : i32 to index
    %c0_1 = arith.constant 0 : index
    %14 = vector.load %arg2[%13, %c0_1] : memref<64x128xf32, #tpu.memory_space<vmem>>, vector<1x128xf32>
    %cst_2 = arith.constant 11.3137083 : f32
    %15 = vector.broadcast %cst_2 : f32 to vector<1x128xf32>
    %16 = arith.mulf %14, %15 : vector<1x128xf32>
    %17 = arith.index_cast %c1_i32 : i32 to index
    %c0_3 = arith.constant 0 : index
    %18 = vector.load %arg3[%17, %c0_3] : memref<8x128xf32, #tpu.memory_space<vmem>>, vector<1x128xf32>
    tpu.vector_store %arg3[%17, %c0_3], %16 {strides = array<i32>} : memref<8x128xf32, #tpu.memory_space<vmem>>, vector<1x128xf32>,
    %c2_i32 = arith.constant 2 : i32
    %19 = arith.addi %0, %c2_i32 : i32
    %20 = arith.index_cast %19 : i32 to index
    %21 = memref.load %arg1[%20] : memref<16xi32, #tpu.memory_space<smem>>
    %22 = arith.index_cast %21 : i32 to index
    %c0_4 = arith.constant 0 : index
    %23 = vector.load %arg2[%22, %c0_4] : memref<64x128xf32, #tpu.memory_space<vmem>>, vector<1x128xf32>
    %cst_5 = arith.constant 11.3137083 : f32
    %24 = vector.broadcast %cst_5 : f32 to vector<1x128xf32>
    %25 = arith.mulf %23, %24 : vector<1x128xf32>
    %26 = arith.index_cast %c2_i32 : i32 to index
    %c0_6 = arith.constant 0 : index
    %27 = vector.load %arg3[%26, %c0_6] : memref<8x128xf32, #tpu.memory_space<vmem>>, vector<1x128xf32>
    tpu.vector_store %arg3[%26, %c0_6], %25 {strides = array<i32>} : memref<8x128xf32, #tpu.memory_space<vmem>>, vector<1x128xf32>,
    %c3_i32 = arith.constant 3 : i32
    %28 = arith.addi %0, %c3_i32 : i32
    %29 = arith.index_cast %28 : i32 to index
    %30 = memref.load %arg1[%29] : memref<16xi32, #tpu.memory_space<smem>>
    %31 = arith.index_cast %30 : i32 to index
    %c0_7 = arith.constant 0 : index
    %32 = vector.load %arg2[%31, %c0_7] : memref<64x128xf32, #tpu.memory_space<vmem>>, vector<1x128xf32>
    %cst_8 = arith.constant 11.3137083 : f32
    %33 = vector.broadcast %cst_8 : f32 to vector<1x128xf32>
    %34 = arith.mulf %32, %33 : vector<1x128xf32>
    %35 = arith.index_cast %c3_i32 : i32 to index
    %c0_9 = arith.constant 0 : index
    %36 = vector.load %arg3[%35, %c0_9] : memref<8x128xf32, #tpu.memory_space<vmem>>, vector<1x128xf32>
    tpu.vector_store %arg3[%35, %c0_9], %34 {strides = array<i32>} : memref<8x128xf32, #tpu.memory_space<vmem>>, vector<1x128xf32>,
    %c4_i32 = arith.constant 4 : i32
    %37 = arith.addi %0, %c4_i32 : i32
    %38 = arith.index_cast %37 : i32 to index
    %39 = memref.load %arg1[%38] : memref<16xi32, #tpu.memory_space<smem>>
    %40 = arith.index_cast %39 : i32 to index
    %c0_10 = arith.constant 0 : index
    %41 = vector.load %arg2[%40, %c0_10] : memref<64x128xf32, #tpu.memory_space<vmem>>, vector<1x128xf32>
    %cst_11 = arith.constant 11.3137083 : f32
    %42 = vector.broadcast %cst_11 : f32 to vector<1x128xf32>
    %43 = arith.mulf %41, %42 : vector<1x128xf32>
    %44 = arith.index_cast %c4_i32 : i32 to index
    %c0_12 = arith.constant 0 : index
    %45 = vector.load %arg3[%44, %c0_12] : memref<8x128xf32, #tpu.memory_space<vmem>>, vector<1x128xf32>
    tpu.vector_store %arg3[%44, %c0_12], %43 {strides = array<i32>} : memref<8x128xf32, #tpu.memory_space<vmem>>, vector<1x128xf32>,
    %c5_i32 = arith.constant 5 : i32
    %46 = arith.addi %0, %c5_i32 : i32
    %47 = arith.index_cast %46 : i32 to index
    %48 = memref.load %arg1[%47] : memref<16xi32, #tpu.memory_space<smem>>
    %49 = arith.index_cast %48 : i32 to index
    %c0_13 = arith.constant 0 : index
    %50 = vector.load %arg2[%49, %c0_13] : memref<64x128xf32, #tpu.memory_space<vmem>>, vector<1x128xf32>
    %cst_14 = arith.constant 11.3137083 : f32
    %51 = vector.broadcast %cst_14 : f32 to vector<1x128xf32>
    %52 = arith.mulf %50, %51 : vector<1x128xf32>
    %53 = arith.index_cast %c5_i32 : i32 to index
    %c0_15 = arith.constant 0 : index
    %54 = vector.load %arg3[%53, %c0_15] : memref<8x128xf32, #tpu.memory_space<vmem>>, vector<1x128xf32>
    tpu.vector_store %arg3[%53, %c0_15], %52 {strides = array<i32>} : memref<8x128xf32, #tpu.memory_space<vmem>>, vector<1x128xf32>,
    %c6_i32 = arith.constant 6 : i32
    %55 = arith.addi %0, %c6_i32 : i32
    %56 = arith.index_cast %55 : i32 to index
    %57 = memref.load %arg1[%56] : memref<16xi32, #tpu.memory_space<smem>>
    %58 = arith.index_cast %57 : i32 to index
    %c0_16 = arith.constant 0 : index
    %59 = vector.load %arg2[%58, %c0_16] : memref<64x128xf32, #tpu.memory_space<vmem>>, vector<1x128xf32>
    %cst_17 = arith.constant 11.3137083 : f32
    %60 = vector.broadcast %cst_17 : f32 to vector<1x128xf32>
    %61 = arith.mulf %59, %60 : vector<1x128xf32>
    %62 = arith.index_cast %c6_i32 : i32 to index
    %c0_18 = arith.constant 0 : index
    %63 = vector.load %arg3[%62, %c0_18] : memref<8x128xf32, #tpu.memory_space<vmem>>, vector<1x128xf32>
    tpu.vector_store %arg3[%62, %c0_18], %61 {strides = array<i32>} : memref<8x128xf32, #tpu.memory_space<vmem>>, vector<1x128xf32>,
    %c7_i32 = arith.constant 7 : i32
    %64 = arith.addi %0, %c7_i32 : i32
    %65 = arith.index_cast %64 : i32 to index
    %66 = memref.load %arg1[%65] : memref<16xi32, #tpu.memory_space<smem>>
    %67 = arith.index_cast %66 : i32 to index
    %c0_19 = arith.constant 0 : index
    %68 = vector.load %arg2[%67, %c0_19] : memref<64x128xf32, #tpu.memory_space<vmem>>, vector<1x128xf32>
    %cst_20 = arith.constant 11.3137083 : f32
    %69 = vector.broadcast %cst_20 : f32 to vector<1x128xf32>
    %70 = arith.mulf %68, %69 : vector<1x128xf32>
    %71 = arith.index_cast %c7_i32 : i32 to index
    %c0_21 = arith.constant 0 : index
    %72 = vector.load %arg3[%71, %c0_21] : memref<8x128xf32, #tpu.memory_space<vmem>>, vector<1x128xf32>
    tpu.vector_store %arg3[%71, %c0_21], %70 {strides = array<i32>} : memref<8x128xf32, #tpu.memory_space<vmem>>, vector<1x128xf32>,
    %c8_i32_22 = arith.constant 8 : i32
    return
  }
  func.func @transform_0(%arg0: i32, %arg1: memref<16xi32, #tpu.memory_space<smem>>) -> (i32, i32) {
    %c0_i32 = arith.constant 0 : i32
    %c0_i32_0 = arith.constant 0 : i32
    %c0_i32_1 = arith.constant 0 : i32
    return %c0_i32, %c0_i32_0 : i32, i32
  }
  func.func @transform_1(%arg0: i32, %arg1: memref<16xi32, #tpu.memory_space<smem>>) -> (i32, i32) {
    %c0_i32 = arith.constant 0 : i32
    %c0_i32_0 = arith.constant 0 : i32
    return %arg0, %c0_i32 : i32, i32
  }
}

</mosaic_0001>

<llo_original>
// kernel: tpu_custom_call.1
$region0: #{tpu_custom_call.1}
  #allocation0 [shape = 'u32[]', space=smem, size = 0x4, offset = 0x4, fixed_abs, tag = 'smem constant byte address 0x4 - core index']
  #allocation1 [shape = 'u32[144,128]{1,0:T(1,128)}', space=vmem, size = 0x12000, scoped, tag = 'internal scratch']
  #allocation2 [shape = 's32[1]{0}', space=sflag, size = 0x4, scoped, tag = 'scoped memory for tpu_custom_call.1']
  #allocation3 [shape = 'u8[512]{0}', space=smem, size = 0x200, scoped, tag = 'prefetched SMEM operand 0']
  %s0 = inlined_call_operand.hbm [shape: s32[16], index: 0, kind: input, shape index: {}]
  %s1 = inlined_call_operand.hbm [shape: f32[64,128], index: 1, kind: input, shape index: {}]
  %s2 = inlined_call_operand.hbm [shape: f32[16,128], index: 2, kind: output, shape index: {}]
  %s3 = sld [smem:[#allocation0]]
  $region41: #{tpu_custom_call.1} parent=0
    _
  %s5 = ssub.s32 1, %s3
  %s6 = scalar_select 0, %s5, %s3
  %8 = dma.hbm_to_smem %s0, 16, [#allocation3], [#allocation2]
  %9 = dma.done [#allocation2], 16
  %10 = sfence
  $region1: #{tpu_custom_call.1} parent=0
    #allocation4 [shape = 'u8[32768]{0}', space=vmem, size = 0x8000, scoped, tag = 'input window, operand 1, single buffered']
    #allocation5 [shape = 's32[2]{0}', space=sflag, size = 0x8, scoped, tag = 'scoped memory for tpu_custom_call.1']
    #allocation6 [shape = 's32[2]{0}', space=sflag, size = 0x8, scoped, tag = 'scoped memory for tpu_custom_call.1']
    #allocation7 [shape = 'u8[8192]{0}', space=vmem, size = 0x2000, scoped, tag = 'output window, operand 0']
    %11 = vsyncpa [#allocation5], 0
    %12 = vsyncpa [#allocation6], 0
    %s13 = scalar_lea.sflag [#allocation6], 1
    %14 = vsyncpa %s13, 0
    loop: start=0, step=1, limit=4
    $region2: #{tpu_custom_call.1} parent=1 // loop_pre_header
      _
    $region3: #{tpu_custom_call.1} parent=1 // loop_header
      %s16 = sphi 0, %s20
      %p17 = scmp.ge.s32.totalorder %s16, 4
      %s24 = sphi 0, %s24
      %s26 = sphi 0, %s24
      %s27 = sphi 0, %s26
      %s41 = sphi 0, %s27
      %s47 = sphi 0, %s49
      %s50 = sphi 0, %s47
      %s51 = sphi 0, %s50
      %s67 = sphi 0, %s51
    $region4: #{tpu_custom_call.1} parent=1 // loop_header_branch
      %19 = sbr.rel (%p17) target = $region8
    $region5: #{tpu_custom_call.1} parent=1 // loop_body
      %s21 = ssub.s32 %s16, 1
      %s22 = ssub.s32 %s16, 2
      %s23 = sadd.s32 %s16, 1
      %s25 = sadd.s32 %s24, 1
      %p28 = scmp.eq.s32.totalorder %s16, 1
      %p29 = scmp.ne.s32.totalorder %s24, %s26
      %p30 = scmp.eq.s32.totalorder %s16, 0
      %p31 = por %p29, %p30
      %p32 = scmp.ne.s32.totalorder %s24, %s26
      %p33 = scmp.eq.s32.totalorder %s21, 1
      %p34 = por %p32, %p33
      %p35 = scmp.ne.s32.totalorder %s26, %s27
      %p36 = scmp.eq.s32.totalorder %s21, 0
      %p37 = por %p35, %p36
      %p38 = scmp.ne.s32.totalorder %s26, %s27
      %p39 = scmp.eq.s32.totalorder %s22, 1
      %p40 = por %p38, %p39
      %p42 = scmp.ne.s32.totalorder %s27, %s41
      %p43 = scmp.eq.s32.totalorder %s22, 0
      %p44 = por %p42, %p43
      %s45 = ssub.s32 %s16, %s23
      %p46 = scmp.eq.s32.totalorder %s45, 0
      %s48 = sadd.s32 %s47, 1
      %s49 = scalar_select %p46, %s47, %s48
      %p52 = pneg %p46
      %p53 = scmp.eq.s32.totalorder %s16, 1
      %p54 = por %p52, %p53
      %p55 = scmp.ne.s32.totalorder %s47, %s50
      %p56 = scmp.eq.s32.totalorder %s16, 0
      %p57 = por %p55, %p56
      %p58 = scmp.ne.s32.totalorder %s47, %s50
      %p59 = scmp.eq.s32.totalorder %s21, 1
      %p60 = por %p58, %p59
      %p61 = scmp.ne.s32.totalorder %s50, %s51
      %p62 = scmp.eq.s32.totalorder %s21, 0
      %p63 = por %p61, %p62
      %p64 = scmp.ne.s32.totalorder %s50, %s51
      %p65 = scmp.eq.s32.totalorder %s22, 1
      %p66 = por %p64, %p65
      %p68 = scmp.ne.s32.totalorder %s51, %s67
      %p69 = scmp.eq.s32.totalorder %s22, 0
      %p70 = por %p68, %p69
      %p71 = scmp.le.s32.totalorder 1, %s16
      %p72 = scmp.lt.s32.totalorder %s16, 3
      %p73 = pnand %p71, %p72
      %p74 = pneg %p73
      // Predicated region
      $region9: #{tpu_custom_call.1} parent=5 // pred_check
        _
      $region10: #{tpu_custom_call.1} parent=5 // pred_check_branch
        %76 = sbr.rel (%p73) target = $region12
      $region11: #{tpu_custom_call.1} parent=5 // pred_region
        %s77 = ssub.s32 %s16, 1
        // Predicated region
        $region13: #{tpu_custom_call.1} parent=11 // pred_check
          %p78 = pneg %p37
        $region14: #{tpu_custom_call.1} parent=11 // pred_check_branch
          %80 = sbr.rel (%p78) target = $region16
        $region15: #{tpu_custom_call.1} parent=11 // pred_region
          %s82 = ssub.s32 1024, 1024
          %83 = vsyncadd [#allocation5], %s82
          %s84 = sshll.u32 [#allocation4], 4
          %s85 = int_to_ptr.vmem [resolvable:$true] %s84
          %90 = dma.hbm_to_vmem [thread:$0]  %s1, 1024, %s85, [#allocation5], 128, 128, 8
        $region16: #{tpu_custom_call.1} parent=11 // pred_fallthru
          _
      $region12: #{tpu_custom_call.1} parent=5 // pred_fallthru
        _
      %p91 = scmp.lt.s32.totalorder %s16, 2
      // Predicated region
      $region17: #{tpu_custom_call.1} parent=5 // pred_check
        %p92 = pneg %p91
      $region18: #{tpu_custom_call.1} parent=5 // pred_check_branch
        %94 = sbr.rel (%p92) target = $region20
      $region19: #{tpu_custom_call.1} parent=5 // pred_region
        _
      $region20: #{tpu_custom_call.1} parent=5 // pred_fallthru
        _
      %p95 = scmp.le.s32.totalorder 1, %s16
      %p96 = scmp.lt.s32.totalorder %s16, 3
      %p97 = pnand %p95, %p96
      %p98 = pneg %p97
      // Predicated region
      $region21: #{tpu_custom_call.1} parent=5 // pred_check
        _
      $region22: #{tpu_custom_call.1} parent=5 // pred_check_branch
        %100 = sbr.rel (%p97) target = $region24
      $region23: #{tpu_custom_call.1} parent=5 // pred_region
        %s101 = ssub.s32 %s16, 1
        // Predicated region
        $region25: #{tpu_custom_call.1} parent=23 // pred_check
          %p102 = pneg %p37
        $region26: #{tpu_custom_call.1} parent=23 // pred_check_branch
          %104 = sbr.rel (%p102) target = $region28
        $region27: #{tpu_custom_call.1} parent=23 // pred_region
          %105 = dma.done [#allocation5], 1024
        $region28: #{tpu_custom_call.1} parent=23 // pred_fallthru
          _
        %p106 = pneg %p37
        %p107 = pneg %p34
        %p108 = pneg %p63
        %p109 = pneg %p60
        %s110 = sand.u32 %s50, 1
        %s111 = scalar_lea.sflag [#allocation6], %s110
        %s112 = sand.u32 %s50, 1
        %s113 = smul.addr %s112, 8
        %s114 = scalar_lea.vmem [#allocation7], %s113
        %s115 = smul.u32 %s21, 8
        %s116 = sld [smem:[#allocation3 + %s115]]
        %s117 = scalar_lea.vmem [#allocation4], %s116
        %v118 = vld [vmem:[%s117] sm:$0x1]
        %v119 = vmul.f32 %v118, 11.313708
        %120 = vst [vmem:[%s114] sm:$0x1] %v119
        %s121 = sadd.s32 %s115, 1
        %s122 = sld [smem:[#allocation3 + %s121]]
        %s123 = scalar_lea.vmem [#allocation4], %s122
        %v124 = vld [vmem:[%s123] sm:$0x1]
        %v125 = vmul.f32 %v124, 11.313708
        %126 = vst [vmem:[%s114 + $0x1] sm:$0x1] %v125
        %s127 = sadd.s32 %s115, 2
        %s128 = sld [smem:[#allocation3 + %s127]]
        %s129 = scalar_lea.vmem [#allocation4], %s128
        %v130 = vld [vmem:[%s129] sm:$0x1]
        %v131 = vmul.f32 %v130, 11.313708
        %132 = vst [vmem:[%s114 + $0x2] sm:$0x1] %v131
        %s133 = sadd.s32 %s115, 3
        %s134 = sld [smem:[#allocation3 + %s133]]
        %s135 = scalar_lea.vmem [#allocation4], %s134
        %v136 = vld [vmem:[%s135] sm:$0x1]
        %v137 = vmul.f32 %v136, 11.313708
        %138 = vst [vmem:[%s114 + $0x3] sm:$0x1] %v137
        %s139 = sadd.s32 %s115, 4
        %s140 = sld [smem:[#allocation3 + %s139]]
        %s141 = scalar_lea.vmem [#allocation4], %s140
        %v142 = vld [vmem:[%s141] sm:$0x1]
        %v143 = vmul.f32 %v142, 11.313708
        %144 = vst [vmem:[%s114 + $0x4] sm:$0x1] %v143
        %s145 = sadd.s32 %s115, 5
        %s146 = sld [smem:[#allocation3 + %s145]]
        %s147 = scalar_lea.vmem [#allocation4], %s146
        %v148 = vld [vmem:[%s147] sm:$0x1]
        %v149 = vmul.f32 %v148, 11.313708
        %150 = vst [vmem:[%s114 + $0x5] sm:$0x1] %v149
        %s151 = sadd.s32 %s115, 6
        %s152 = sld [smem:[#allocation3 + %s151]]
        %s153 = scalar_lea.vmem [#allocation4], %s152
        %v154 = vld [vmem:[%s153] sm:$0x1]
        %v155 = vmul.f32 %v154, 11.313708
        %156 = vst [vmem:[%s114 + $0x6] sm:$0x1] %v155
        %s157 = sadd.s32 %s115, 7
        %s158 = sld [smem:[#allocation3 + %s157]]
        %s159 = scalar_lea.vmem [#allocation4], %s158
        %v160 = vld [vmem:[%s159] sm:$0x1]
        %v161 = vmul.f32 %v160, 11.313708
        %162 = vst [vmem:[%s114 + $0x7] sm:$0x1] %v161
        %s163 = sand.u32 %s50, 1
        %s164 = scalar_lea.sflag [#allocation6], %s163
        %s165 = sand.u32 %s50, 1
        %s166 = smul.addr %s165, 8
        %s167 = scalar_lea.vmem [#allocation7], %s166
        // Predicated region
        $region29: #{tpu_custom_call.1} parent=23 // pred_check
          %p168 = pneg %p60
        $region30: #{tpu_custom_call.1} parent=23 // pred_check_branch
          %170 = sbr.rel (%p168) target = $region32
        $region31: #{tpu_custom_call.1} parent=23 // pred_region
          %s172 = ssub.s32 128, 128
          %173 = vsyncadd %s164, %s172
          %s174 = smul.addr %s21, 128
          %s175 = scalar_lea.hbm %s2, %s174
          %s177 = sshll.u32 %s167, 4
          %s178 = int_to_ptr.vmem [resolvable:$true] %s177
          %180 = dma.vmem_to_hbm [thread:$0]  %s178, 128, %s175, %s164
        $region32: #{tpu_custom_call.1} parent=23 // pred_fallthru
          _
      $region24: #{tpu_custom_call.1} parent=5 // pred_fallthru
        _
      %p181 = scmp.le.s32.totalorder 2, %s16
      // Predicated region
      $region33: #{tpu_custom_call.1} parent=5 // pred_check
        %p182 = pneg %p181
      $region34: #{tpu_custom_call.1} parent=5 // pred_check_branch
        %184 = sbr.rel (%p182) target = $region36
      $region35: #{tpu_custom_call.1} parent=5 // pred_region
        %s185 = ssub.s32 %s16, 2
        // Predicated region
        $region37: #{tpu_custom_call.1} parent=35 // pred_check
          %p186 = pneg %p66
        $region38: #{tpu_custom_call.1} parent=35 // pred_check_branch
          %188 = sbr.rel (%p186) target = $region40
        $region39: #{tpu_custom_call.1} parent=35 // pred_region
          %s189 = sand.u32 %s51, 1
          %s190 = scalar_lea.sflag [#allocation6], %s189
          %s191 = sand.u32 %s51, 1
          %s192 = smul.addr %s191, 8
          %s193 = scalar_lea.vmem [#allocation7], %s192
          %194 = dma.done %s190, 128
        $region40: #{tpu_custom_call.1} parent=35 // pred_fallthru
          _
      $region36: #{tpu_custom_call.1} parent=5 // pred_fallthru
        _
    $region6: #{tpu_custom_call.1} parent=1 // loop_footer
      %s20 = sadd.s32 1, %s16
    $region7: #{tpu_custom_call.1} parent=1 // loop_footer_branch
      %15 = sbr.rel target = $region3
    $region8: #{tpu_custom_call.1} parent=1 // loop_exit
      _
    %195 = vsyncpa [#allocation5], 1
    %s196 = scalar_lea.sflag [#allocation5], 1
    %197 = vsyncpa %s196, 1
    %198 = vsyncpa [#allocation6], 1
    %s199 = scalar_lea.sflag [#allocation6], 1
    %200 = vsyncpa %s199, 1

</llo_original>
